<compile_context>
chip_gen: v6e
topology: v6e:2x2x1
jax: 0.10.0
libtpu: 0.0.40
codegen_flags: <defaults>
</compile_context>

<pallas_src>
import functools
import math

import jax
import jax.numpy as jnp
from jax import lax
from jax.experimental import pallas as pl
from jax.experimental.pallas import tpu as pltpu

EPS = 1e-8


def _round_up(v, m):
    return (v + m - 1) // m * m


def _static_int_pow(v, p):
    # p is a static Python int >= 1: unrolled multiplies stay on the VPU
    # (a traced/float gamma would lower to exp(g*log(s)) on the EUP).
    r = v
    for _ in range(int(p) - 1):
        r = r * v
    return r


def _ppm_kernel(gamma, cdt, ones_row,
                x_q_ref, x_k_ref, invq_ref, invk_ref, w_ref, o_ref,
                xnqt_ref, acc_ref):
    j = pl.program_id(2)

    @pl.when(j == 0)
    def _init():
        # Build the normalized, transposed query tile once per (b, i).  The
        # all-ones ssum channel row is masked to 0 on the query side so it
        # never contributes to the cosine similarity.
        xq = x_q_ref[...].astype(jnp.float32)                        # [C_pad, TI]
        ch = lax.broadcasted_iota(jnp.int32, (xq.shape[0], 1), 0)
        xnq = jnp.where(ch == ones_row, 0.0, xq * invq_ref[...])
        xnqt_ref[...] = jnp.transpose(xnq).astype(cdt)               # [TI, C_pad]
        acc_ref[...] = jnp.zeros_like(acc_ref)

    # Key tile is read exactly once (already in the MXU dtype); a single f32
    # multiply by the precomputed inverse norm, then cast for the MXU.
    x_k = x_k_ref[...]                                               # [C_pad, TJ]
    xnk = (x_k.astype(jnp.float32) * invk_ref[...]).astype(cdt)

    # s[i, j] = relu(<xn_i, xn_j>) ** gamma on a [TI, TJ] tile.
    s = jnp.dot(xnqt_ref[...], xnk, preferred_element_type=jnp.float32)
    s = jnp.maximum(s, 0.0)
    if isinstance(gamma, int) and gamma >= 1:
        s = _static_int_pow(s, gamma)
    else:
        s = s ** gamma
    s_c = s.astype(cdt)

    # acc[c, i] += sum_j x_aug[c, j] * s[i, j]   (contract TJ of both: x @ s^T).
    # Row `ones_row` of x_aug is all ones, so it accumulates sum_j s[i, j] for
    # free inside the same MXU weight push.
    acc_ref[...] += lax.dot_general(
        x_k, s_c, (((1,), (1,)), ((), ())),
        preferred_element_type=jnp.float32)

    @pl.when(j == pl.num_programs(2) - 1)
    def _finalize():
        # W_ext carries the conv bias in column `ones_row`, so
        #   W_ext @ acc == W (sum_j s_ij x_j) + b * sum_j s_ij
        # i.e. the 1x1 conv applied after aggregation, as a single matmul.
        o_ref[...] = jnp.dot(
            w_ref[...], acc_ref[...],
            preferred_element_type=jnp.float32).astype(o_ref.dtype)


def ppm_forward(x_nchw, w, bias, gamma=2, *,
                tile_i=512, tile_j=512, mxu_dtype=jnp.bfloat16):
    """x_nchw: [B, C, H, W] float32; w: [C, C]; bias: [C]."""
    B, C, H, W_sp = x_nchw.shape
    N = H * W_sp
    out_dtype = x_nchw.dtype

    # One extra channel row (always zero w.r.t. the real data) holds the
    # all-ones ssum channel; 16-alignment keeps bf16 sublane tiling happy.
    C_pad = _round_up(C + 1, 16)
    ones_row = C

    # Decoupled query/key tiles; cap for v7x VMEM headroom when C is large.
    cap = 512 if C_pad >= 512 else 1024
    N_128 = _round_up(N, 128)
    TI = min(_round_up(min(max(tile_i, 128), cap), 128), N_128)
    TJ = min(_round_up(min(max(tile_j, 128), cap), 128), N_128)
    N_pad = _round_up(N, math.lcm(TI, TJ))
    n_i, n_j = N_pad // TI, N_pad // TJ

    xf = x_nchw.reshape(B, C, N).astype(jnp.float32)

    # Per-pixel inverse L2 norms, computed once (matches reference:
    # 1 / max(||x||, EPS)).  Padded pixels get inv = 0 -> contribute nothing.
    inv = 1.0 / jnp.maximum(
        jnp.sqrt(jnp.sum(xf * xf, axis=1, keepdims=True)), EPS)       # [B, 1, N]
    inv_p = jnp.pad(inv, ((0, 0), (0, 0), (0, N_pad - N)))

    # Pad x, write the all-ones ssum channel, pre-cast to the MXU dtype.
    x_p = jnp.pad(xf, ((0, 0), (0, C_pad - C), (0, N_pad - N)))
    x_p = x_p.at[:, ones_row, :].set(1.0).astype(mxu_dtype)

    # Extended conv weight: W top-left, bias folded into column `ones_row`.
    w_p = (jnp.zeros((C_pad, C_pad), jnp.float32)
           .at[:C, :C].set(w.astype(jnp.float32))
           .at[:C, ones_row].set(bias.astype(jnp.float32)))

    kernel = functools.partial(_ppm_kernel, gamma, mxu_dtype, ones_row)

    x_bytes = jnp.dtype(mxu_dtype).itemsize
    cost = pl.CostEstimate(
        flops=int(B * (4 * C_pad * N_pad * N_pad + 2 * C_pad * C_pad * N_pad)),
        transcendentals=0 if isinstance(gamma, int) else int(B * N_pad * N_pad),
        bytes_accessed=int(
            x_bytes * B * C_pad * N_pad * (n_i + 1)     # keys re-read n_i times + queries
            + 4 * B * N_pad * (n_i + 1)                 # inverse norms
            + 4 * B * C_pad * N_pad                     # output
            + 4 * C_pad * C_pad),                       # conv weight
    )

    # NOTE: if xprof shows exposed key-tile DMA on v5e/v6e, the key BlockSpec
    # can additionally take pipeline_mode=pl.Buffered(3).
    out = pl.pallas_call(
        kernel,
        out_shape=jax.ShapeDtypeStruct((B, C_pad, N_pad), out_dtype),
        grid_spec=pltpu.PrefetchScalarGridSpec(
            num_scalar_prefetch=0,
            grid=(B, n_i, n_j),
            in_specs=[
                pl.BlockSpec((None, C_pad, TI), lambda b, i, j: (b, 0, i)),  # queries
                pl.BlockSpec((None, C_pad, TJ), lambda b, i, j: (b, 0, j)),  # keys
                pl.BlockSpec((None, 1, TI), lambda b, i, j: (b, 0, i)),      # inv_q
                pl.BlockSpec((None, 1, TJ), lambda b, i, j: (b, 0, j)),      # inv_k
                pl.BlockSpec((C_pad, C_pad), lambda b, i, j: (0, 0)),        # W_ext (f32)
            ],
            out_specs=pl.BlockSpec((None, C_pad, TI), lambda b, i, j: (b, 0, i)),
            scratch_shapes=[
                pltpu.VMEM((TI, C_pad), mxu_dtype),    # xn_i^T, built once per i
                pltpu.VMEM((C_pad, TI), jnp.float32),  # acc[c, i] (ssum in ones_row)
            ]),
        compiler_params=pltpu.CompilerParams(
            dimension_semantics=("parallel", "parallel", "arbitrary")),
        cost_estimate=cost,
    )(x_p, x_p, inv_p, inv_p, w_p)

    return out[:, :C, :N].reshape(B, C, H, W_sp)


def ppm_reference(x_nchw, w, bias, gamma=2):
    """Pure-JAX reference mirroring the PyTorch forward."""
    B, C, H, W_sp = x_nchw.shape
    xf = x_nchw.reshape(B, C, H * W_sp).astype(jnp.float32)
    norm = jnp.maximum(jnp.sqrt(jnp.sum(xf * xf, axis=1, keepdims=True)), EPS)
    xn = xf / norm
    s = jnp.einsum('bcn,bcm->bnm', xn, xn)
    s = jnp.maximum(s, 0.0) ** gamma
    gx = jnp.einsum('ck,bkn->bcn', w, xf) + bias[None, :, None]
    out = jnp.einsum('bnm,bcm->bcn', s, gx)
    return out.reshape(B, C, H, W_sp)


def _make_inputs(key, B, C, H, W_sp):
    kx, kw, kb = jax.random.split(key, 3)
    x = jax.random.normal(kx, (B, C, H, W_sp), dtype=jnp.float32)
    # Deterministic 1x1-conv params (nn.Conv2d(nin, nin, 1)): weight [C, C], bias [C].
    bound = 1.0 / (C ** 0.5)
    w = jax.random.uniform(kw, (C, C), minval=-bound, maxval=bound,
                           dtype=jnp.float32)
    b = jax.random.uniform(kb, (C,), minval=-bound, maxval=bound,
                           dtype=jnp.float32)
    return x, w, b


if __name__ == "__main__":
    # Case 1: primary shapes (C=4 -> C_pad=16, N=256).  Small explicit tiles
    # exercise the multi-i-tile / multi-j-accumulation path.
    x, w, b = _make_inputs(jax.random.PRNGKey(0), 2, 4, 16, 16)
    ref = ppm_reference(x, w, b, gamma=2)

    out_f32 = jax.block_until_ready(
        ppm_forward(x, w, b, gamma=2, tile_i=128, tile_j=128,
                    mxu_dtype=jnp.float32))
    assert out_f32.shape == ref.shape
    assert jnp.allclose(out_f32, ref, atol=1e-4, rtol=1e-4), "f32 path mismatch"

    # Decoupled TI != TJ, bf16 storage/MXU path.
    out_bf16 = jax.block_until_ready(
        ppm_forward(x, w, b, gamma=2, tile_i=256, tile_j=128,
                    mxu_dtype=jnp.bfloat16))
    rel = jnp.max(jnp.abs(out_bf16 - ref)) / (jnp.max(jnp.abs(ref)) + 1e-6)
    assert rel < 5e-2, f"bf16 decoupled-tile path mismatch (rel err {rel})"

    # Default (large-tile) config.
    out_def = jax.block_until_ready(ppm_forward(x, w, b, gamma=2))
    rel_d = jnp.max(jnp.abs(out_def - ref)) / (jnp.max(jnp.abs(ref)) + 1e-6)
    assert rel_d < 5e-2, f"default-config mismatch (rel err {rel_d})"

    # Case 2: PixPro-like 7x7 feature map (N=49 -> lane-padded to 128), C=16
    # (C already a multiple of 16 -> extra sublane group for the ones row).
    x2, w2, b2 = _make_inputs(jax.random.PRNGKey(1), 2, 16, 7, 7)
    ref2 = ppm_reference(x2, w2, b2, gamma=2)
    out2 = jax.block_until_ready(ppm_forward(x2, w2, b2, gamma=2))
    rel2 = jnp.max(jnp.abs(out2 - ref2)) / (jnp.max(jnp.abs(ref2)) + 1e-6)
    assert rel2 < 5e-2, f"padded-N path mismatch (rel err {rel2})"

    print("KERNEL_OK")
</pallas_src>

<mosaic_0001>
module attributes {stable_mosaic.version = 11 : i64} {
  func.func @_ppm_kernel(%arg0: i32, %arg1: i32, %arg2: i32, %arg3: memref<1x16x128xf32, #tpu.memory_space<vmem>>, %arg4: memref<1x16x128xf32, #tpu.memory_space<vmem>>, %arg5: memref<1x1x128xf32, #tpu.memory_space<vmem>>, %arg6: memref<1x1x128xf32, #tpu.memory_space<vmem>>, %arg7: memref<16x16xf32, #tpu.memory_space<vmem>>, %arg8: memref<1x16x128xf32, #tpu.memory_space<vmem>>, %arg9: memref<128x16xf32, #tpu.memory_space<vmem>>, %arg10: memref<16x128xf32, #tpu.memory_space<vmem>>) attributes {dimension_semantics = [#tpu.dimension_semantics<parallel>, #tpu.dimension_semantics<parallel>, #tpu.dimension_semantics<arbitrary>], iteration_bounds = array<i64: 2, 2, 2>, scalar_prefetch = 0 : i64, scratch_operands = 2 : i64, tpu.core_type = #tpu.core_type<tc>, window_params = [{transform_indices = @transform_0, window_bounds = array<i64: 1, 16, 128>}, {transform_indices = @transform_1, window_bounds = array<i64: 1, 16, 128>}, {transform_indices = @transform_2, window_bounds = array<i64: 1, 1, 128>}, {transform_indices = @transform_3, window_bounds = array<i64: 1, 1, 128>}, {pipeline_mode = #tpu.pipeline_mode<synchronous>, transform_indices = @transform_4, window_bounds = array<i64: 16, 16>}, {transform_indices = @transform_5, window_bounds = array<i64: 1, 16, 128>}]} {
    %c0_i32 = arith.constant 0 : i32
    %0 = arith.cmpi eq, %arg2, %c0_i32 : i32
    %1 = arith.extui %0 : i1 to i32
    %c0_i32_0 = arith.constant 0 : i32
    %2 = arith.cmpi ne, %1, %c0_i32_0 : i32
    scf.if %2 {
      %c0_15 = arith.constant 0 : index
      %c0_16 = arith.constant 0 : index
      %c0_17 = arith.constant 0 : index
      %21 = vector.load %arg3[%c0_15, %c0_16, %c0_17] : memref<1x16x128xf32, #tpu.memory_space<vmem>>, vector<1x16x128xf32>
      %22 = vector.shape_cast %21 : vector<1x16x128xf32> to vector<16x128xf32>
      %23 = tpu.iota {dimensions = array<i32: 0>} : vector<16x1xi32>
      %c4_i32 = arith.constant 4 : i32
      %24 = vector.broadcast %c4_i32 : i32 to vector<16x1xi32>
      %25 = arith.cmpi eq, %23, %24 : vector<16x1xi32>
      %c0_18 = arith.constant 0 : index
      %c0_19 = arith.constant 0 : index
      %c0_20 = arith.constant 0 : index
      %26 = vector.load %arg5[%c0_18, %c0_19, %c0_20] : memref<1x1x128xf32, #tpu.memory_space<vmem>>, vector<1x1x128xf32>
      %27 = vector.shape_cast %26 : vector<1x1x128xf32> to vector<1x128xf32>
      %28 = vector.broadcast %27 : vector<1x128xf32> to vector<16x128xf32>
      %29 = arith.mulf %22, %28 : vector<16x128xf32>
      %cst_21 = arith.constant 0.000000e+00 : f32
      %30 = vector.shape_cast %25 : vector<16x1xi1> to vector<16x1xi1>
      %31 = vector.broadcast %30 : vector<16x1xi1> to vector<16x128xi1>
      %32 = vector.broadcast %cst_21 : f32 to vector<16x128xf32>
      %33 = arith.select %31, %32, %29 : vector<16x128xi1>, vector<16x128xf32>
      %34 = tpu.transpose %33, [1, 0] : vector<16x128xf32> -> vector<128x16xf32>
      %c0_22 = arith.constant 0 : index
      %c0_23 = arith.constant 0 : index
      %35 = vector.load %arg9[%c0_22, %c0_23] : memref<128x16xf32, #tpu.memory_space<vmem>>, vector<128x16xf32>
      tpu.vector_store %arg9[%c0_22, %c0_23], %34 {strides = array<i32>} : memref<128x16xf32, #tpu.memory_space<vmem>>, vector<128x16xf32>,
      %cst_24 = arith.constant 0.000000e+00 : f32
      %36 = vector.broadcast %cst_24 : f32 to vector<16x128xf32>
      %c0_25 = arith.constant 0 : index
      %c0_26 = arith.constant 0 : index
      %37 = vector.load %arg10[%c0_25, %c0_26] : memref<16x128xf32, #tpu.memory_space<vmem>>, vector<16x128xf32>
      tpu.vector_store %arg10[%c0_25, %c0_26], %36 {strides = array<i32>} : memref<16x128xf32, #tpu.memory_space<vmem>>, vector<16x128xf32>,
    } else {
    }
    %c0 = arith.constant 0 : index
    %c0_1 = arith.constant 0 : index
    %c0_2 = arith.constant 0 : index
    %3 = vector.load %arg4[%c0, %c0_1, %c0_2] : memref<1x16x128xf32, #tpu.memory_space<vmem>>, vector<1x16x128xf32>
    %4 = vector.shape_cast %3 : vector<1x16x128xf32> to vector<16x128xf32>
    %c0_3 = arith.constant 0 : index
    %c0_4 = arith.constant 0 : index
    %c0_5 = arith.constant 0 : index
    %5 = vector.load %arg6[%c0_3, %c0_4, %c0_5] : memref<1x1x128xf32, #tpu.memory_space<vmem>>, vector<1x1x128xf32>
    %6 = vector.shape_cast %5 : vector<1x1x128xf32> to vector<1x128xf32>
    %7 = vector.broadcast %6 : vector<1x128xf32> to vector<16x128xf32>
    %8 = arith.mulf %4, %7 : vector<16x128xf32>
    %c0_6 = arith.constant 0 : index
    %c0_7 = arith.constant 0 : index
    %9 = vector.load %arg9[%c0_6, %c0_7] : memref<128x16xf32, #tpu.memory_space<vmem>>, vector<128x16xf32>
    %cst = arith.constant dense<0.000000e+00> : vector<128x128xf32>
    %10 = tpu.matmul %9, %8, %cst {dimension_numbers = #tpu.dot_dimension_numbers<[1], [0], [0], [1], [0, 0, 1, 1], [], []>} : vector<128x16xf32>, vector<16x128xf32>, vector<128x128xf32> -> vector<128x128xf32>
    %cst_8 = arith.constant 0.000000e+00 : f32
    %11 = vector.broadcast %cst_8 : f32 to vector<128x128xf32>
    %12 = arith.maximumf %10, %11 : vector<128x128xf32>
    %13 = arith.mulf %12, %12 : vector<128x128xf32>
    %c0_9 = arith.constant 0 : index
    %c0_10 = arith.constant 0 : index
    %14 = vector.load %arg10[%c0_9, %c0_10] : memref<16x128xf32, #tpu.memory_space<vmem>>, vector<16x128xf32>
    %cst_11 = arith.constant dense<0.000000e+00> : vector<16x128xf32>
    %15 = tpu.matmul %4, %13, %cst_11 {dimension_numbers = #tpu.dot_dimension_numbers<[1], [1], [0], [0], [0, 0, 1, 0], [], []>} : vector<16x128xf32>, vector<128x128xf32>, vector<16x128xf32> -> vector<16x128xf32>
    %16 = arith.addf %14, %15 : vector<16x128xf32>
    %c0_12 = arith.constant 0 : index
    %c0_13 = arith.constant 0 : index
    %17 = vector.load %arg10[%c0_12, %c0_13] : memref<16x128xf32, #tpu.memory_space<vmem>>, vector<16x128xf32>
    tpu.vector_store %arg10[%c0_12, %c0_13], %16 {strides = array<i32>} : memref<16x128xf32, #tpu.memory_space<vmem>>, vector<16x128xf32>,
    %c1_i32 = arith.constant 1 : i32
    %18 = arith.cmpi eq, %arg2, %c1_i32 : i32
    %19 = arith.extui %18 : i1 to i32
    %c0_i32_14 = arith.constant 0 : i32
    %20 = arith.cmpi ne, %19, %c0_i32_14 : i32
    scf.if %20 {
      %c0_15 = arith.constant 0 : index
      %c0_16 = arith.constant 0 : index
      %21 = vector.load %arg7[%c0_15, %c0_16] : memref<16x16xf32, #tpu.memory_space<vmem>>, vector<16x16xf32>
      %c0_17 = arith.constant 0 : index
      %c0_18 = arith.constant 0 : index
      %22 = vector.load %arg10[%c0_17, %c0_18] : memref<16x128xf32, #tpu.memory_space<vmem>>, vector<16x128xf32>
      %cst_19 = arith.constant dense<0.000000e+00> : vector<16x128xf32>
      %23 = tpu.matmul %21, %22, %cst_19 {dimension_numbers = #tpu.dot_dimension_numbers<[1], [0], [0], [1], [0, 0, 1, 1], [], []>} : vector<16x16xf32>, vector<16x128xf32>, vector<16x128xf32> -> vector<16x128xf32>
      %c0_20 = arith.constant 0 : index
      %c0_21 = arith.constant 0 : index
      %c0_22 = arith.constant 0 : index
      %24 = vector.load %arg8[%c0_20, %c0_21, %c0_22] : memref<1x16x128xf32, #tpu.memory_space<vmem>>, vector<1x16x128xf32>
      %25 = vector.shape_cast %24 : vector<1x16x128xf32> to vector<16x128xf32>
      %26 = vector.shape_cast %23 : vector<16x128xf32> to vector<1x16x128xf32>
      tpu.vector_store %arg8[%c0_20, %c0_21, %c0_22], %26 {strides = array<i32>} : memref<1x16x128xf32, #tpu.memory_space<vmem>>, vector<1x16x128xf32>,
    } else {
    }
    return
  }
  func.func @transform_0(%arg0: i32, %arg1: i32, %arg2: i32) -> (i32, i32, i32) {
    %c0_i32 = arith.constant 0 : i32
    %c0_i32_0 = arith.constant 0 : i32
    return %arg0, %c0_i32, %arg1 : i32, i32, i32
  }
  func.func @transform_1(%arg0: i32, %arg1: i32, %arg2: i32) -> (i32, i32, i32) {
    %c0_i32 = arith.constant 0 : i32
    %c0_i32_0 = arith.constant 0 : i32
    return %arg0, %c0_i32, %arg2 : i32, i32, i32
  }
  func.func @transform_2(%arg0: i32, %arg1: i32, %arg2: i32) -> (i32, i32, i32) {
    %c0_i32 = arith.constant 0 : i32
    %c0_i32_0 = arith.constant 0 : i32
    return %arg0, %c0_i32, %arg1 : i32, i32, i32
  }
  func.func @transform_3(%arg0: i32, %arg1: i32, %arg2: i32) -> (i32, i32, i32) {
    %c0_i32 = arith.constant 0 : i32
    %c0_i32_0 = arith.constant 0 : i32
    return %arg0, %c0_i32, %arg2 : i32, i32, i32
  }
  func.func @transform_4(%arg0: i32, %arg1: i32, %arg2: i32) -> (i32, i32) {
    %c0_i32 = arith.constant 0 : i32
    %c0_i32_0 = arith.constant 0 : i32
    %c0_i32_1 = arith.constant 0 : i32
    return %c0_i32, %c0_i32_0 : i32, i32
  }
  func.func @transform_5(%arg0: i32, %arg1: i32, %arg2: i32) -> (i32, i32, i32) {
    %c0_i32 = arith.constant 0 : i32
    %c0_i32_0 = arith.constant 0 : i32
    return %arg0, %c0_i32, %arg1 : i32, i32, i32
  }
}

</mosaic_0001>

<llo_original>
// kernel: tpu_custom_call.1
$region0: #{tpu_custom_call.1}
  #allocation0 [shape = 'u32[]', space=smem, size = 0x4, offset = 0x4, fixed_abs, tag = 'smem constant byte address 0x4 - core index']
  #allocation1 [shape = 'u32[144,128]{1,0:T(1,128)}', space=vmem, size = 0x12000, scoped, tag = 'internal scratch']
  #allocation2 [shape = 'f32[128,16]{1,0:T(8,128)}', space=vmem, size = 0x10000, scoped, tag = 'scratch operand']
  #allocation3 [shape = 'f32[16,128]{1,0:T(8,128)}', space=vmem, size = 0x2000, scoped, tag = 'scratch operand']
  %s0 = inlined_call_operand.hbm [shape: f32[2,16,256], index: 0, kind: input, shape index: {}]
  %s1 = inlined_call_operand.hbm [shape: f32[2,16,256], index: 1, kind: input, shape index: {}]
  %s2 = inlined_call_operand.hbm [shape: f32[2,1,256], index: 2, kind: input, shape index: {}]
  %s3 = inlined_call_operand.vmem [shape: f32[2,1,256], index: 3, kind: input, shape index: {}]
  %s4 = inlined_call_operand.hbm [shape: f32[16,16], index: 4, kind: input, shape index: {}]
  %s5 = inlined_call_operand.hbm [shape: f32[2,16,256], index: 5, kind: output, shape index: {}]
  %s6 = sld [smem:[#allocation0]]
  $region77: #{tpu_custom_call.1} parent=0
    _
  %s8 = ssub.s32 1, %s6
  %s9 = scalar_select 0, %s8, %s6
  $region1: #{tpu_custom_call.1} parent=0
    #allocation4 [shape = 'u8[16384]{0}', space=vmem, size = 0x4000, scoped, tag = 'input window, operand 0']
    #allocation5 [shape = 's32[2]{0}', space=sflag, size = 0x8, scoped, tag = 'scoped memory for tpu_custom_call.1']
    #allocation6 [shape = 's32[2]{0}', space=sflag, size = 0x8, scoped, tag = 'scoped memory for tpu_custom_call.1']
    #allocation7 [shape = 'u8[16384]{0}', space=vmem, size = 0x4000, scoped, tag = 'input window, operand 1']
    #allocation8 [shape = 's32[2]{0}', space=sflag, size = 0x8, scoped, tag = 'scoped memory for tpu_custom_call.1']
    #allocation9 [shape = 'u8[1024]{0}', space=vmem, size = 0x400, scoped, tag = 'input window, operand 2']
    #allocation10 [shape = 'u8[8192]{0}', space=vmem, size = 0x2000, scoped, tag = 'input window, operand 4, single buffered']
    #allocation11 [shape = 's32[1]{0}', space=sflag, size = 0x4, scoped, tag = 'scoped memory for tpu_custom_call.1']
    #allocation12 [shape = 'u8[16384]{0}', space=vmem, size = 0x4000, scoped, tag = 'output window, operand 0']
    %10 = vsyncpa [#allocation5], 0
    %s11 = scalar_lea.sflag [#allocation5], 1
    %12 = vsyncpa %s11, 0
    %13 = vsyncpa [#allocation8], 0
    %s14 = scalar_lea.sflag [#allocation8], 1
    %15 = vsyncpa %s14, 0
    %16 = vsyncpa [#allocation11], 0
    %17 = vsyncpa [#allocation6], 0
    %s18 = scalar_lea.sflag [#allocation6], 1
    %19 = vsyncpa %s18, 0
    loop: start=0, step=1, limit=10
    $region2: #{tpu_custom_call.1} parent=1 // loop_pre_header
      _
    $region3: #{tpu_custom_call.1} parent=1 // loop_header
      %s21 = sphi 0, %s25
      %p22 = scmp.ge.s32.totalorder %s21, 10
      %s28 = sphi 0, %s47
      %s29 = sphi 0, %s43
      %s30 = sphi 0, %s39
      %s31 = sphi 0, %s28
      %s32 = sphi 0, %s29
      %s33 = sphi 0, %s30
      %s34 = sphi 0, %s31
      %s35 = sphi 0, %s32
      %s36 = sphi 0, %s33
      %s52 = sphi 0, %s54
      %s55 = sphi 0, %s52
      %s56 = sphi 0, %s55
      %s72 = sphi 0, %s56
      %s80 = sphi 0, %s82
      %s83 = sphi 0, %s80
      %s84 = sphi 0, %s83
      %s100 = sphi 0, %s84
      %s108 = sphi 0, %s110
      %s111 = sphi 0, %s108
      %s112 = sphi 0, %s111
      %s128 = sphi 0, %s112
      %s136 = sphi 0, %s138
      %s139 = sphi 0, %s136
      %s140 = sphi 0, %s139
      %s156 = sphi 0, %s140
      %s160 = sphi 0, %s160
      %s162 = sphi 0, %s160
      %s163 = sphi 0, %s162
      %s177 = sphi 0, %s163
      %s185 = sphi 0, %s187
      %s188 = sphi 0, %s185
      %s189 = sphi 0, %s188
      %s205 = sphi 0, %s189
    $region4: #{tpu_custom_call.1} parent=1 // loop_header_branch
      %24 = sbr.rel (%p22) target = $region8
    $region5: #{tpu_custom_call.1} parent=1 // loop_body
      %s26 = ssub.s32 %s21, 1
      %s27 = ssub.s32 %s21, 2
      %s37 = sadd.s32 1, %s30
      %p38 = scmp.ge.s32.totalorder %s37, 2
      %s39 = scalar_select %p38, 0, %s37
      %s40 = sadd.s32 1, %s29
      %s41 = scalar_select %p38, %s40, %s29
      %p42 = scmp.ge.s32.totalorder %s41, 2
      %s43 = scalar_select %p42, 0, %s41
      %s44 = sadd.s32 1, %s28
      %s45 = scalar_select %p42, %s44, %s28
      %p46 = scmp.ge.s32.totalorder %s45, 2
      %s47 = scalar_select %p46, 0, %s45
      %s48 = ssub.s32 %s28, %s47
      %s49 = ssub.s32 %s29, %s43
      %s50 = sor.u32 %s48, %s49
      %p51 = scmp.eq.s32.totalorder %s50, 0
      %s53 = sadd.s32 %s52, 1
      %s54 = scalar_select %p51, %s52, %s53
      %p57 = pneg %p51
      %p58 = scmp.eq.s32.totalorder %s21, 7
      %p59 = por %p57, %p58
      %p60 = scmp.ne.s32.totalorder %s52, %s55
      %p61 = scmp.eq.s32.totalorder %s21, 0
      %p62 = por %p60, %p61
      %p63 = scmp.ne.s32.totalorder %s52, %s55
      %p64 = scmp.eq.s32.totalorder %s26, 7
      %p65 = por %p63, %p64
      %p66 = scmp.ne.s32.totalorder %s55, %s56
      %p67 = scmp.eq.s32.totalorder %s26, 0
      %p68 = por %p66, %p67
      %p69 = scmp.ne.s32.totalorder %s55, %s56
      %p70 = scmp.eq.s32.totalorder %s27, 7
      %p71 = por %p69, %p70
      %p73 = scmp.ne.s32.totalorder %s56, %s72
      %p74 = scmp.eq.s32.totalorder %s27, 0
      %p75 = por %p73, %p74
      %s76 = ssub.s32 %s28, %s47
      %s77 = ssub.s32 %s30, %s39
      %s78 = sor.u32 %s76, %s77
      %p79 = scmp.eq.s32.totalorder %s78, 0
      %s81 = sadd.s32 %s80, 1
      %s82 = scalar_select %p79, %s80, %s81
      %p85 = pneg %p79
      %p86 = scmp.eq.s32.totalorder %s21, 7
      %p87 = por %p85, %p86
      %p88 = scmp.ne.s32.totalorder %s80, %s83
      %p89 = scmp.eq.s32.totalorder %s21, 0
      %p90 = por %p88, %p89
      %p91 = scmp.ne.s32.totalorder %s80, %s83
      %p92 = scmp.eq.s32.totalorder %s26, 7
      %p93 = por %p91, %p92
      %p94 = scmp.ne.s32.totalorder %s83, %s84
      %p95 = scmp.eq.s32.totalorder %s26, 0
      %p96 = por %p94, %p95
      %p97 = scmp.ne.s32.totalorder %s83, %s84
      %p98 = scmp.eq.s32.totalorder %s27, 7
      %p99 = por %p97, %p98
      %p101 = scmp.ne.s32.totalorder %s84, %s100
      %p102 = scmp.eq.s32.totalorder %s27, 0
      %p103 = por %p101, %p102
      %s104 = ssub.s32 %s28, %s47
      %s105 = ssub.s32 %s29, %s43
      %s106 = sor.u32 %s104, %s105
      %p107 = scmp.eq.s32.totalorder %s106, 0
      %s109 = sadd.s32 %s108, 1
      %s110 = scalar_select %p107, %s108, %s109
      %p113 = pneg %p107
      %p114 = scmp.eq.s32.totalorder %s21, 7
      %p115 = por %p113, %p114
      %p116 = scmp.ne.s32.totalorder %s108, %s111
      %p117 = scmp.eq.s32.totalorder %s21, 0
      %p118 = por %p116, %p117
      %p119 = scmp.ne.s32.totalorder %s108, %s111
      %p120 = scmp.eq.s32.totalorder %s26, 7
      %p121 = por %p119, %p120
      %p122 = scmp.ne.s32.totalorder %s111, %s112
      %p123 = scmp.eq.s32.totalorder %s26, 0
      %p124 = por %p122, %p123
      %p125 = scmp.ne.s32.totalorder %s111, %s112
      %p126 = scmp.eq.s32.totalorder %s27, 7
      %p127 = por %p125, %p126
      %p129 = scmp.ne.s32.totalorder %s112, %s128
      %p130 = scmp.eq.s32.totalorder %s27, 0
      %p131 = por %p129, %p130
      %s132 = ssub.s32 %s28, %s47
      %s133 = ssub.s32 %s30, %s39
      %s134 = sor.u32 %s132, %s133
      %p135 = scmp.eq.s32.totalorder %s134, 0
      %s137 = sadd.s32 %s136, 1
      %s138 = scalar_select %p135, %s136, %s137
      %p141 = pneg %p135
      %p142 = scmp.eq.s32.totalorder %s21, 7
      %p143 = por %p141, %p142
      %p144 = scmp.ne.s32.totalorder %s136, %s139
      %p145 = scmp.eq.s32.totalorder %s21, 0
      %p146 = por %p144, %p145
      %p147 = scmp.ne.s32.totalorder %s136, %s139
      %p148 = scmp.eq.s32.totalorder %s26, 7
      %p149 = por %p147, %p148
      %p150 = scmp.ne.s32.totalorder %s139, %s140
      %p151 = scmp.eq.s32.totalorder %s26, 0
      %p152 = por %p150, %p151
      %p153 = scmp.ne.s32.totalorder %s139, %s140
      %p154 = scmp.eq.s32.totalorder %s27, 7
      %p155 = por %p153, %p154
      %p157 = scmp.ne.s32.totalorder %s140, %s156
      %p158 = scmp.eq.s32.totalorder %s27, 0
      %p159 = por %p157, %p158
      %s161 = sadd.s32 %s160, 1
      %p164 = scmp.eq.s32.totalorder %s21, 7
      %p165 = scmp.ne.s32.totalorder %s160, %s162
      %p166 = scmp.eq.s32.totalorder %s21, 0
      %p167 = por %p165, %p166
      %p168 = scmp.ne.s32.totalorder %s160, %s162
      %p169 = scmp.eq.s32.totalorder %s26, 7
      %p170 = por %p168, %p169
      %p171 = scmp.ne.s32.totalorder %s162, %s163
      %p172 = scmp.eq.s32.totalorder %s26, 0
      %p173 = por %p171, %p172
      %p174 = scmp.ne.s32.totalorder %s162, %s163
      %p175 = scmp.eq.s32.totalorder %s27, 7
      %p176 = por %p174, %p175
      %p178 = scmp.ne.s32.totalorder %s163, %s177
      %p179 = scmp.eq.s32.totalorder %s27, 0
      %p180 = por %p178, %p179
      %s181 = ssub.s32 %s28, %s47
      %s182 = ssub.s32 %s29, %s43
      %s183 = sor.u32 %s181, %s182
      %p184 = scmp.eq.s32.totalorder %s183, 0
      %s186 = sadd.s32 %s185, 1
      %s187 = scalar_select %p184, %s185, %s186
      %p190 = pneg %p184
      %p191 = scmp.eq.s32.totalorder %s21, 7
      %p192 = por %p190, %p191
      %p193 = scmp.ne.s32.totalorder %s185, %s188
      %p194 = scmp.eq.s32.totalorder %s21, 0
      %p195 = por %p193, %p194
      %p196 = scmp.ne.s32.totalorder %s185, %s188
      %p197 = scmp.eq.s32.totalorder %s26, 7
      %p198 = por %p196, %p197
      %p199 = scmp.ne.s32.totalorder %s188, %s189
      %p200 = scmp.eq.s32.totalorder %s26, 0
      %p201 = por %p199, %p200
      %p202 = scmp.ne.s32.totalorder %s188, %s189
      %p203 = scmp.eq.s32.totalorder %s27, 7
      %p204 = por %p202, %p203
      %p206 = scmp.ne.s32.totalorder %s189, %s205
      %p207 = scmp.eq.s32.totalorder %s27, 0
      %p208 = por %p206, %p207
      %p209 = scmp.le.s32.totalorder 1, %s21
      %p210 = scmp.lt.s32.totalorder %s21, 9
      %p211 = pnand %p209, %p210
      %p212 = pneg %p211
      // Predicated region
      $region9: #{tpu_custom_call.1} parent=5 // pred_check
        _
      $region10: #{tpu_custom_call.1} parent=5 // pred_check_branch
        %214 = sbr.rel (%p211) target = $region12
      $region11: #{tpu_custom_call.1} parent=5 // pred_region
        %s215 = ssub.s32 %s21, 1
        // Predicated region
        $region13: #{tpu_custom_call.1} parent=11 // pred_check
          %p216 = pneg %p173
        $region14: #{tpu_custom_call.1} parent=11 // pred_check_branch
          %218 = sbr.rel (%p216) target = $region16
        $region15: #{tpu_custom_call.1} parent=11 // pred_region
          %s220 = ssub.s32 256, 256
          %221 = vsyncadd [#allocation11], %s220
          %s222 = sshll.u32 [#allocation10], 4
          %s223 = int_to_ptr.vmem [resolvable:$true] %s222
          %228 = dma.hbm_to_vmem [thread:$0]  %s4, 256, %s223, [#allocation11], 128, 128, 8
        $region16: #{tpu_custom_call.1} parent=11 // pred_fallthru
          _
      $region12: #{tpu_custom_call.1} parent=5 // pred_fallthru
        _
      %p229 = scmp.lt.s32.totalorder %s21, 8
      // Predicated region
      $region17: #{tpu_custom_call.1} parent=5 // pred_check
        %p230 = pneg %p229
      $region18: #{tpu_custom_call.1} parent=5 // pred_check_branch
        %232 = sbr.rel (%p230) target = $region20
      $region19: #{tpu_custom_call.1} parent=5 // pred_region
        // Predicated region
        $region21: #{tpu_custom_call.1} parent=19 // pred_check
          %p233 = pneg %p62
        $region22: #{tpu_custom_call.1} parent=19 // pred_check_branch
          %235 = sbr.rel (%p233) target = $region24
        $region23: #{tpu_custom_call.1} parent=19 // pred_region
          %s236 = sand.u32 %s52, 1
          %s237 = scalar_lea.sflag [#allocation5], %s236
          %s238 = sand.u32 %s52, 1
          %s239 = smul.addr %s238, 16
          %s240 = scalar_lea.vmem [#allocation4], %s239
          %s242 = ssub.s32 256, 256
          %243 = vsyncadd %s237, %s242
          %s244 = smul.addr %s28, 4
          %s245 = sadd.s32 %s29, %s244
          %s246 = smul.addr %s245, 128
          %s247 = scalar_lea.hbm %s0, %s246
          %s248 = sshll.u32 %s240, 4
          %s249 = int_to_ptr.vmem [resolvable:$true] %s248
          %254 = dma.hbm_to_vmem [thread:$0]  %s247, 256, %s249, %s237, 256, 128, 8
        $region24: #{tpu_custom_call.1} parent=19 // pred_fallthru
          _
        // Predicated region
        $region25: #{tpu_custom_call.1} parent=19 // pred_check
          %p255 = pneg %p90
        $region26: #{tpu_custom_call.1} parent=19 // pred_check_branch
          %257 = sbr.rel (%p255) target = $region28
        $region27: #{tpu_custom_call.1} parent=19 // pred_region
          %s258 = sand.u32 %s21, 1
          %s259 = scalar_lea.sflag [#allocation8], %s258
          %s260 = sand.u32 %s80, 1
          %s261 = smul.addr %s260, 16
          %s262 = scalar_lea.vmem [#allocation7], %s261
          %s264 = ssub.s32 256, 256
          %265 = vsyncadd %s259, %s264
          %s266 = smul.addr %s28, 4
          %s267 = sadd.s32 %s30, %s266
          %s268 = smul.addr %s267, 128
          %s269 = scalar_lea.hbm %s1, %s268
          %s270 = sshll.u32 %s262, 4
          %s271 = int_to_ptr.vmem [resolvable:$true] %s270
          %276 = dma.hbm_to_vmem [thread:$0]  %s269, 256, %s271, %s259, 256, 128, 8
        $region28: #{tpu_custom_call.1} parent=19 // pred_fallthru
          _
        // Predicated region
        $region29: #{tpu_custom_call.1} parent=19 // pred_check
          %p277 = pneg %p118
        $region30: #{tpu_custom_call.1} parent=19 // pred_check_branch
          %279 = sbr.rel (%p277) target = $region32
        $region31: #{tpu_custom_call.1} parent=19 // pred_region
          %s280 = sand.u32 %s21, 1
          %s281 = scalar_lea.sflag [#allocation8], %s280
          %s282 = sand.u32 %s108, 1
          %s283 = scalar_lea.vmem [#allocation9], %s282
          %s285 = ssub.s32 16, 16
          %286 = vsyncadd %s281, %s285
          %s287 = smul.addr %s28, 2
          %s288 = sadd.s32 %s29, %s287
          %s289 = smul.addr %s288, 16
          %s290 = scalar_lea.hbm %s2, %s289
          %s292 = sshll.u32 %s283, 4
          %s293 = int_to_ptr.vmem [resolvable:$true] %s292
          %295 = dma.hbm_to_vmem [thread:$0]  %s290, 16, %s293, %s281
        $region32: #{tpu_custom_call.1} parent=19 // pred_fallthru
          _
        // Predicated region
        $region33: #{tpu_custom_call.1} parent=19 // pred_check
          %p296 = pneg %p146
        $region34: #{tpu_custom_call.1} parent=19 // pred_check_branch
          %298 = sbr.rel (%p296) target = $region36
        $region35: #{tpu_custom_call.1} parent=19 // pred_region
          %p299 = scmp.lt.s32.totalorder %s28, 1
          %s300 = scalar_select %p299, %s28, 1
          %p301 = scmp.lt.s32.totalorder %s30, 1
          %s302 = scalar_select %p301, %s30, 1
          %s303 = smul.addr %s300, 2
          %s304 = sadd.s32 %s302, %s303
          %s305 = scalar_lea.vmem %s3, %s304
        $region36: #{tpu_custom_call.1} parent=19 // pred_fallthru
          _
      $region20: #{tpu_custom_call.1} parent=5 // pred_fallthru
        _
      %p306 = scmp.le.s32.totalorder 1, %s21
      %p307 = scmp.lt.s32.totalorder %s21, 9
      %p308 = pnand %p306, %p307
      %p309 = pneg %p308
      // Predicated region
      $region37: #{tpu_custom_call.1} parent=5 // pred_check
        _
      $region38: #{tpu_custom_call.1} parent=5 // pred_check_branch
        %311 = sbr.rel (%p308) target = $region40
      $region39: #{tpu_custom_call.1} parent=5 // pred_region
        %s312 = ssub.s32 %s21, 1
        %s313 = sand.u32 %s55, 1
        %s314 = scalar_lea.sflag [#allocation5], %s313
        %s315 = sand.u32 %s55, 1
        %s316 = smul.addr %s315, 16
        %s317 = scalar_lea.vmem [#allocation4], %s316
        // Predicated region
        $region41: #{tpu_custom_call.1} parent=39 // pred_check
          %p318 = pneg %p68
        $region42: #{tpu_custom_call.1} parent=39 // pred_check_branch
          %320 = sbr.rel (%p318) target = $region44
        $region43: #{tpu_custom_call.1} parent=39 // pred_region
          %321 = dma.done %s314, 256
        $region44: #{tpu_custom_call.1} parent=39 // pred_fallthru
          _
        %s322 = sand.u32 %s26, 1
        %s323 = scalar_lea.sflag [#allocation8], %s322
        %s324 = sand.u32 %s83, 1
        %s325 = smul.addr %s324, 16
        %s326 = scalar_lea.vmem [#allocation7], %s325
        // Predicated region
        $region45: #{tpu_custom_call.1} parent=39 // pred_check
          %p327 = pneg %p96
        $region46: #{tpu_custom_call.1} parent=39 // pred_check_branch
          %329 = sbr.rel (%p327) target = $region48
        $region47: #{tpu_custom_call.1} parent=39 // pred_region
          %330 = dma.done %s323, 256
        $region48: #{tpu_custom_call.1} parent=39 // pred_fallthru
          _
        %s331 = sand.u32 %s26, 1
        %s332 = scalar_lea.sflag [#allocation8], %s331
        %s333 = sand.u32 %s111, 1
        %s334 = scalar_lea.vmem [#allocation9], %s333
        // Predicated region
        $region49: #{tpu_custom_call.1} parent=39 // pred_check
          %p335 = pneg %p124
        $region50: #{tpu_custom_call.1} parent=39 // pred_check_branch
          %337 = sbr.rel (%p335) target = $region52
        $region51: #{tpu_custom_call.1} parent=39 // pred_region
          %338 = dma.done %s332, 16
        $region52: #{tpu_custom_call.1} parent=39 // pred_fallthru
          _
        // Predicated region
        $region53: #{tpu_custom_call.1} parent=39 // pred_check
          %p339 = pneg %p173
        $region54: #{tpu_custom_call.1} parent=39 // pred_check_branch
          %341 = sbr.rel (%p339) target = $region56
        $region55: #{tpu_custom_call.1} parent=39 // pred_region
          %342 = dma.done [#allocation11], 256
        $region56: #{tpu_custom_call.1} parent=39 // pred_fallthru
          _
        %s343 = sand.u32 %s55, 1
        %s344 = scalar_lea.sflag [#allocation5], %s343
        %s345 = sand.u32 %s55, 1
        %s346 = smul.addr %s345, 16
        %s347 = scalar_lea.vmem [#allocation4], %s346
        %p348 = pneg %p68
        %p349 = pneg %p65
        %s350 = sand.u32 %s26, 1
        %s351 = scalar_lea.sflag [#allocation8], %s350
        %s352 = sand.u32 %s83, 1
        %s353 = smul.addr %s352, 16
        %s354 = scalar_lea.vmem [#allocation7], %s353
        %p355 = pneg %p96
        %p356 = pneg %p93
        %s357 = sand.u32 %s26, 1
        %s358 = scalar_lea.sflag [#allocation8], %s357
        %s359 = sand.u32 %s111, 1
        %s360 = scalar_lea.vmem [#allocation9], %s359
        %p361 = pneg %p124
        %p362 = pneg %p121
        %p363 = scmp.lt.s32.totalorder %s31, 1
        %s364 = scalar_select %p363, %s31, 1
        %p365 = scmp.lt.s32.totalorder %s33, 1
        %s366 = scalar_select %p365, %s33, 1
        %s367 = smul.addr %s364, 2
        %s368 = sadd.s32 %s366, %s367
        %s369 = scalar_lea.vmem %s3, %s368
        %p370 = pneg %p152
        %p371 = pneg %p149
        %p372 = pneg %p173
        %p373 = pneg %p170
        %p374 = pneg %p201
        %p375 = pneg %p198
        %s376 = sand.u32 %s188, 1
        %s377 = scalar_lea.sflag [#allocation6], %s376
        %s378 = sand.u32 %s188, 1
        %s379 = smul.addr %s378, 16
        %s380 = scalar_lea.vmem [#allocation12], %s379
        %p381 = scmp.lt.s32.totalorder %s31, 1
        %s382 = scalar_select %p381, %s31, 1
        %p383 = scmp.lt.s32.totalorder %s33, 1
        %s384 = scalar_select %p383, %s33, 1
        %s385 = smul.addr %s382, 2
        %s386 = sadd.s32 %s384, %s385
        %s387 = scalar_lea.vmem %s3, %s386
        %p388 = scmp.eq.s32.totalorder %s33, 0
        // Predicated region
        $region57: #{tpu_custom_call.1} parent=39 // pred_check
          %p389 = pneg %p388
        $region58: #{tpu_custom_call.1} parent=39 // pred_check_branch
          %391 = sbr.rel (%p389) target = $region60
        $region59: #{tpu_custom_call.1} parent=39 // pred_region
          %v392 = vld [vmem:[%s317] sm:$0xff]
          %v393 = vld [vmem:[%s317 + $0x8] sm:$0xff]
          %v394 = vlaneseq
          %v395 = vshrl.u32 %v394, 7
          %v396 = vadd.s32 %v395, 8
          %vm397 = vcmp.eq.s32.totalorder %v395, 4
          %vm398 = vcmp.eq.s32.totalorder %v396, 4
          %v399 = vld [vmem:[%s334] sm:$0x1]
          %v401 = vlaneseq
          %v402 = vshrl.u32 %v401, 7
          %v403 = vsub.s32 0, %v402
          %v404 = vrot.slane %v399, %v403
          %v406 = vmul.f32 %v392, %v404
          %v407 = vmul.f32 %v393, %v404
          %v408 = vsel %vm397, 1, 0
          %v409 = vsel %vm398, 1, 0
          %vm410 = vcmp.eq.s32.totalorder %v408, 1
          %vm411 = vcmp.eq.s32.totalorder %v409, 1
          %v412 = vsel %vm410, 0.0, %v406
          %v413 = vsel %vm411, 0.0, %v407
          %414 = vxpose.xlu0.b32.start [1/16] %v412, 128
          %415 = vxpose.xlu0.b32.cont [2/16] %v413, 128
          %416 = vxpose.xlu0.b32.cont [3/16] 0.0, 128
          %417 = vxpose.xlu0.b32.cont [4/16] 0.0, 128
          %418 = vxpose.xlu0.b32.cont [5/16] 0.0, 128
          %419 = vxpose.xlu0.b32.cont [6/16] 0.0, 128
          %420 = vxpose.xlu0.b32.cont [7/16] 0.0, 128
          %421 = vxpose.xlu0.b32.cont [8/16] 0.0, 128
          %422 = vxpose.xlu0.b32.cont [9/16] 0.0, 128
          %423 = vxpose.xlu0.b32.cont [10/16] 0.0, 128
          %424 = vxpose.xlu0.b32.cont [11/16] 0.0, 128
          %425 = vxpose.xlu0.b32.cont [12/16] 0.0, 128
          %426 = vxpose.xlu0.b32.cont [13/16] 0.0, 128
          %427 = vxpose.xlu0.b32.cont [14/16] 0.0, 128
          %428 = vxpose.xlu0.b32.cont [15/16] 0.0, 128
          %429 = vxpose.xlu0.b32.end [16/16] 0.0, 128
          %v430 = vpop.trf.xlu0
          %v431 = vpop.trf.xlu0
          %v432 = vpop.trf.xlu0
          %v433 = vpop.trf.xlu0
          %v434 = vpop.trf.xlu0
          %v435 = vpop.trf.xlu0
          %v436 = vpop.trf.xlu0
          %v437 = vpop.trf.xlu0
          %v438 = vpop.trf.xlu0
          %v439 = vpop.trf.xlu0
          %v440 = vpop.trf.xlu0
          %v441 = vpop.trf.xlu0
          %v442 = vpop.trf.xlu0
          %v443 = vpop.trf.xlu0
          %v444 = vpop.trf.xlu0
          %v445 = vpop.trf.xlu0
          %vm446 = vcmask 130048
          %447 = vst.msk [vmem:[#allocation2] sm:$0xff] %vm446, %v430
          %448 = vst.msk [vmem:[#allocation2 + $0x8] sm:$0xff] %vm446, %v431
          %449 = vst.msk [vmem:[#allocation2 + $0x10] sm:$0xff] %vm446, %v432
          %450 = vst.msk [vmem:[#allocation2 + $0x18] sm:$0xff] %vm446, %v433
          %451 = vst.msk [vmem:[#allocation2 + $0x20] sm:$0xff] %vm446, %v434
          %452 = vst.msk [vmem:[#allocation2 + $0x28] sm:$0xff] %vm446, %v435
          %453 = vst.msk [vmem:[#allocation2 + $0x30] sm:$0xff] %vm446, %v436
          %454 = vst.msk [vmem:[#allocation2 + $0x38] sm:$0xff] %vm446, %v437
          %455 = vst.msk [vmem:[#allocation2 + $0x40] sm:$0xff] %vm446, %v438
          %456 = vst.msk [vmem:[#allocation2 + $0x48] sm:$0xff] %vm446, %v439
          %457 = vst.msk [vmem:[#allocation2 + $0x50] sm:$0xff] %vm446, %v440
          %458 = vst.msk [vmem:[#allocation2 + $0x58] sm:$0xff] %vm446, %v441
          %459 = vst.msk [vmem:[#allocation2 + $0x60] sm:$0xff] %vm446, %v442
          %460 = vst.msk [vmem:[#allocation2 + $0x68] sm:$0xff] %vm446, %v443
          %461 = vst.msk [vmem:[#allocation2 + $0x70] sm:$0xff] %vm446, %v444
          %462 = vst.msk [vmem:[#allocation2 + $0x78] sm:$0xff] %vm446, %v445
          %463 = vst [vmem:[#allocation3] sm:$0xff] 0.0
          %464 = vst [vmem:[#allocation3 + $0x8] sm:$0xff] 0.0
        $region60: #{tpu_custom_call.1} parent=39 // pred_fallthru
          _
        %v465 = vld [vmem:[%s326] sm:$0xff]
        %v466 = vld [vmem:[%s326 + $0x8] sm:$0xff]
        %v467 = vld [vmem:[%s387] sm:$0x1]
        %v469 = vlaneseq
        %v470 = vshrl.u32 %v469, 7
        %v471 = vsub.s32 0, %v470
        %v472 = vrot.slane %v467, %v471
        %v474 = vmul.f32 %v465, %v472
        %v475 = vmul.f32 %v466, %v472
        %v476 = vld [vmem:[#allocation2] sm:$0xff]
        %v477 = vld [vmem:[#allocation2 + $0x8] sm:$0xff]
        %v478 = vld [vmem:[#allocation2 + $0x10] sm:$0xff]
        %v479 = vld [vmem:[#allocation2 + $0x18] sm:$0xff]
        %v480 = vld [vmem:[#allocation2 + $0x20] sm:$0xff]
        %v481 = vld [vmem:[#allocation2 + $0x28] sm:$0xff]
        %v482 = vld [vmem:[#allocation2 + $0x30] sm:$0xff]
        %v483 = vld [vmem:[#allocation2 + $0x38] sm:$0xff]
        %v484 = vld [vmem:[#allocation2 + $0x40] sm:$0xff]
        %v485 = vld [vmem:[#allocation2 + $0x48] sm:$0xff]
        %v486 = vld [vmem:[#allocation2 + $0x50] sm:$0xff]
        %v487 = vld [vmem:[#allocation2 + $0x58] sm:$0xff]
        %v488 = vld [vmem:[#allocation2 + $0x60] sm:$0xff]
        %v489 = vld [vmem:[#allocation2 + $0x68] sm:$0xff]
        %v490 = vld [vmem:[#allocation2 + $0x70] sm:$0xff]
        %v491 = vld [vmem:[#allocation2 + $0x78] sm:$0xff]
        %vm492 = vcmask 130048
        %v494 = vsel %vm492, %v476, 0
        %v497 = vsel %vm492, %v477, 0
        %v500 = vsel %vm492, %v478, 0
        %v503 = vsel %vm492, %v479, 0
        %v506 = vsel %vm492, %v480, 0
        %v509 = vsel %vm492, %v481, 0
        %v512 = vsel %vm492, %v482, 0
        %v515 = vsel %vm492, %v483, 0
        %v518 = vsel %vm492, %v484, 0
        %v521 = vsel %vm492, %v485, 0
        %v524 = vsel %vm492, %v486, 0
        %v527 = vsel %vm492, %v487, 0
        %v530 = vsel %vm492, %v488, 0
        %v533 = vsel %vm492, %v489, 0
        %v536 = vsel %vm492, %v490, 0
        %v539 = vsel %vm492, %v491, 0
        %541 = vmatprep.subr.mxu0 0.0
        %542 = vmatpush1.msra.mxu0 0.0
        %543 = vmatprep.subr.mxu0 0.0
        %544 = vmatpush1.msra.mxu0 0.0
        %545 = vmatprep.subr.mxu0 0.0
        %546 = vmatpush1.msra.mxu0 0.0
        %547 = vmatprep.subr.mxu0 0.0
        %548 = vmatpush1.msra.mxu0 0.0
        %549 = vmatprep.subr.mxu0 0.0
        %550 = vmatpush1.msra.mxu0 0.0
        %551 = vmatprep.subr.mxu0 0.0
        %552 = vmatpush1.msra.mxu0 0.0
        %553 = vmatprep.subr.mxu0 0.0
        %554 = vmatpush1.msra.mxu0 0.0
        %555 = vmatprep.subr.mxu0 0.0
        %556 = vmatpush1.msra.mxu0 0.0
        %557 = vmatprep.subr.mxu0 0.0
        %558 = vmatpush1.msra.mxu0 0.0
        %559 = vmatprep.subr.mxu0 0.0
        %560 = vmatpush1.msra.mxu0 0.0
        %561 = vmatprep.subr.mxu0 0.0
        %562 = vmatpush1.msra.mxu0 0.0
        %563 = vmatprep.subr.mxu0 0.0
        %564 = vmatpush1.msra.mxu0 0.0
        %565 = vmatprep.subr.mxu0 0.0
        %566 = vmatpush1.msra.mxu0 0.0
        %567 = vmatprep.subr.mxu0 0.0
        %568 = vmatpush1.msra.mxu0 0.0
        %569 = vmatprep.subr.mxu0 0.0
        %570 = vmatpush1.msra.mxu0 %v475
        %571 = vmatprep.subr.mxu0 0.0
        %572 = vmatpush1.msra.mxu0 %v474
        %573 = vmatprep.subr.mxu0 0.0
        %574 = vmatpush2.msra.mxu0 0.0
        %575 = vmatprep.subr.mxu0 0.0
        %576 = vmatpush2.msra.mxu0 0.0
        %577 = vmatprep.subr.mxu0 0.0
        %578 = vmatpush2.msra.mxu0 0.0
        %579 = vmatprep.subr.mxu0 0.0
        %580 = vmatpush2.msra.mxu0 0.0
        %581 = vmatprep.subr.mxu0 0.0
        %582 = vmatpush2.msra.mxu0 0.0
        %583 = vmatprep.subr.mxu0 0.0
        %584 = vmatpush2.msra.mxu0 0.0
        %585 = vmatprep.subr.mxu0 0.0
        %586 = vmatpush2.msra.mxu0 0.0
        %587 = vmatprep.subr.mxu0 0.0
        %588 = vmatpush2.msra.mxu0 0.0
        %589 = vmatprep.subr.mxu0 0.0
        %590 = vmatpush2.msra.mxu0 0.0
        %591 = vmatprep.subr.mxu0 0.0
        %592 = vmatpush2.msra.mxu0 0.0
        %593 = vmatprep.subr.mxu0 0.0
        %594 = vmatpush2.msra.mxu0 0.0
        %595 = vmatprep.subr.mxu0 0.0
        %596 = vmatpush2.msra.mxu0 0.0
        %597 = vmatprep.subr.mxu0 0.0
        %598 = vmatpush2.msra.mxu0 0.0
        %599 = vmatprep.subr.mxu0 0.0
        %600 = vmatpush2.msra.mxu0 0.0
        %601 = vmatprep.subr.mxu0 0.0
        %602 = vmatpush2.msra.mxu0 0.0
        %603 = vmatprep.subr.mxu0 0.0
        %604 = vmatpush2.msra.mxu0 0.0
        %605 = vmatprep.mubr.f32.mxu0 0.0
        %606 = vmatmul.mubr.f32.gmra.mxu0 %v494
        %v607 = vpop.f32.mrf.mxu0
        %v608 = vadd.f32 0.0, %v607
        %v609 = vpop.f32.mrf.mxu0
        %610 = vmatprep.mubr.f32.mxu0 0.0
        %611 = vmatmul.mubr.f32.gmra.mxu0 %v497
        %v612 = vpop.f32.mrf.mxu0
        %v613 = vadd.f32 0.0, %v612
        %v614 = vpop.f32.mrf.mxu0
        %615 = vmatprep.mubr.f32.mxu0 0.0
        %616 = vmatmul.mubr.f32.gmra.mxu0 %v500
        %v617 = vpop.f32.mrf.mxu0
        %v618 = vadd.f32 0.0, %v617
        %v619 = vpop.f32.mrf.mxu0
        %620 = vmatprep.mubr.f32.mxu0 0.0
        %621 = vmatmul.mubr.f32.gmra.mxu0 %v503
        %v622 = vpop.f32.mrf.mxu0
        %v623 = vadd.f32 0.0, %v622
        %v624 = vpop.f32.mrf.mxu0
        %625 = vmatprep.mubr.f32.mxu0 0.0
        %626 = vmatmul.mubr.f32.gmra.mxu0 %v506
        %v627 = vpop.f32.mrf.mxu0
        %v628 = vadd.f32 0.0, %v627
        %v629 = vpop.f32.mrf.mxu0
        %630 = vmatprep.mubr.f32.mxu0 0.0
        %631 = vmatmul.mubr.f32.gmra.mxu0 %v509
        %v632 = vpop.f32.mrf.mxu0
        %v633 = vadd.f32 0.0, %v632
        %v634 = vpop.f32.mrf.mxu0
        %635 = vmatprep.mubr.f32.mxu0 0.0
        %636 = vmatmul.mubr.f32.gmra.mxu0 %v512
        %v637 = vpop.f32.mrf.mxu0
        %v638 = vadd.f32 0.0, %v637
        %v639 = vpop.f32.mrf.mxu0
        %640 = vmatprep.mubr.f32.mxu0 0.0
        %641 = vmatmul.mubr.f32.gmra.mxu0 %v515
        %v642 = vpop.f32.mrf.mxu0
        %v643 = vadd.f32 0.0, %v642
        %v644 = vpop.f32.mrf.mxu0
        %645 = vmatprep.mubr.f32.mxu0 0.0
        %646 = vmatmul.mubr.f32.gmra.mxu0 %v518
        %v647 = vpop.f32.mrf.mxu0
        %v648 = vadd.f32 0.0, %v647
        %v649 = vpop.f32.mrf.mxu0
        %650 = vmatprep.mubr.f32.mxu0 0.0
        %651 = vmatmul.mubr.f32.gmra.mxu0 %v521
        %v652 = vpop.f32.mrf.mxu0
        %v653 = vadd.f32 0.0, %v652
        %v654 = vpop.f32.mrf.mxu0
        %655 = vmatprep.mubr.f32.mxu0 0.0
        %656 = vmatmul.mubr.f32.gmra.mxu0 %v524
        %v657 = vpop.f32.mrf.mxu0
        %v658 = vadd.f32 0.0, %v657
        %v659 = vpop.f32.mrf.mxu0
        %660 = vmatprep.mubr.f32.mxu0 0.0
        %661 = vmatmul.mubr.f32.gmra.mxu0 %v527
        %v662 = vpop.f32.mrf.mxu0
        %v663 = vadd.f32 0.0, %v662
        %v664 = vpop.f32.mrf.mxu0
        %665 = vmatprep.mubr.f32.mxu0 0.0
        %666 = vmatmul.mubr.f32.gmra.mxu0 %v530
        %v667 = vpop.f32.mrf.mxu0
        %v668 = vadd.f32 0.0, %v667
        %v669 = vpop.f32.mrf.mxu0
        %670 = vmatprep.mubr.f32.mxu0 0.0
        %671 = vmatmul.mubr.f32.gmra.mxu0 %v533
        %v672 = vpop.f32.mrf.mxu0
        %v673 = vadd.f32 0.0, %v672
        %v674 = vpop.f32.mrf.mxu0
        %675 = vmatprep.mubr.f32.mxu0 0.0
        %676 = vmatmul.mubr.f32.gmra.mxu0 %v536
        %v677 = vpop.f32.mrf.mxu0
        %v678 = vadd.f32 0.0, %v677
        %v679 = vpop.f32.mrf.mxu0
        %680 = vmatprep.mubr.f32.mxu0 0.0
        %681 = vmatmul.mubr.f32.gmra.mxu0 %v539
        %v682 = vpop.f32.mrf.mxu0
        %v683 = vadd.f32 0.0, %v682
        %v684 = vpop.f32.mrf.mxu0
        %685 = vdwg.mxu0
        %v686 = vmax.f32 %v608, 0.0
        %v687 = vmax.f32 %v613, 0.0
        %v688 = vmax.f32 %v618, 0.0
        %v689 = vmax.f32 %v623, 0.0
        %v690 = vmax.f32 %v628, 0.0
        %v691 = vmax.f32 %v633, 0.0
        %v692 = vmax.f32 %v638, 0.0
        %v693 = vmax.f32 %v643, 0.0
        %v694 = vmax.f32 %v648, 0.0
        %v695 = vmax.f32 %v653, 0.0
        %v696 = vmax.f32 %v658, 0.0
        %v697 = vmax.f32 %v663, 0.0
        %v698 = vmax.f32 %v668, 0.0
        %v699 = vmax.f32 %v673, 0.0
        %v700 = vmax.f32 %v678, 0.0
        %v701 = vmax.f32 %v683, 0.0
        %v702 = vmul.f32 %v686, %v686
        %v703 = vmul.f32 %v687, %v687
        %v704 = vmul.f32 %v688, %v688
        %v705 = vmul.f32 %v689, %v689
        %v706 = vmul.f32 %v690, %v690
        %v707 = vmul.f32 %v691, %v691
        %v708 = vmul.f32 %v692, %v692
        %v709 = vmul.f32 %v693, %v693
        %v710 = vmul.f32 %v694, %v694
        %v711 = vmul.f32 %v695, %v695
        %v712 = vmul.f32 %v696, %v696
        %v713 = vmul.f32 %v697, %v697
        %v714 = vmul.f32 %v698, %v698
        %v715 = vmul.f32 %v699, %v699
        %v716 = vmul.f32 %v700, %v700
        %v717 = vmul.f32 %v701, %v701
        %v718 = vld [vmem:[#allocation3] sm:$0xff]
        %v719 = vld [vmem:[#allocation3 + $0x8] sm:$0xff]
        %720 = vmatprep.subr.mxu0 0.0
        %721 = vmatpush1.xpose.msra.mxu0 %v717
        %722 = vmatprep.subr.mxu0 0.0
        %723 = vmatpush1.xpose.msra.mxu0 %v716
        %724 = vmatprep.subr.mxu0 0.0
        %725 = vmatpush1.xpose.msra.mxu0 %v715
        %726 = vmatprep.subr.mxu0 0.0
        %727 = vmatpush1.xpose.msra.mxu0 %v714
        %728 = vmatprep.subr.mxu0 0.0
        %729 = vmatpush1.xpose.msra.mxu0 %v713
        %730 = vmatprep.subr.mxu0 0.0
        %731 = vmatpush1.xpose.msra.mxu0 %v712
        %732 = vmatprep.subr.mxu0 0.0
        %733 = vmatpush1.xpose.msra.mxu0 %v711
        %734 = vmatprep.subr.mxu0 0.0
        %735 = vmatpush1.xpose.msra.mxu0 %v710
        %736 = vmatprep.subr.mxu0 0.0
        %737 = vmatpush1.xpose.msra.mxu0 %v709
        %738 = vmatprep.subr.mxu0 0.0
        %739 = vmatpush1.xpose.msra.mxu0 %v708
        %740 = vmatprep.subr.mxu0 0.0
        %741 = vmatpush1.xpose.msra.mxu0 %v707
        %742 = vmatprep.subr.mxu0 0.0
        %743 = vmatpush1.xpose.msra.mxu0 %v706
        %744 = vmatprep.subr.mxu0 0.0
        %745 = vmatpush1.xpose.msra.mxu0 %v705
        %746 = vmatprep.subr.mxu0 0.0
        %747 = vmatpush1.xpose.msra.mxu0 %v704
        %748 = vmatprep.subr.mxu0 0.0
        %749 = vmatpush1.xpose.msra.mxu0 %v703
        %750 = vmatprep.subr.mxu0 0.0
        %751 = vmatpush1.xpose.msra.mxu0 %v702
        %752 = vmatprep.subr.mxu0 0.0
        %753 = vmatpush2.xpose.msra.mxu0 0.0
        %754 = vmatprep.subr.mxu0 0.0
        %755 = vmatpush2.xpose.msra.mxu0 0.0
        %756 = vmatprep.subr.mxu0 0.0
        %757 = vmatpush2.xpose.msra.mxu0 0.0
        %758 = vmatprep.subr.mxu0 0.0
        %759 = vmatpush2.xpose.msra.mxu0 0.0
        %760 = vmatprep.subr.mxu0 0.0
        %761 = vmatpush2.xpose.msra.mxu0 0.0
        %762 = vmatprep.subr.mxu0 0.0
        %763 = vmatpush2.xpose.msra.mxu0 0.0
        %764 = vmatprep.subr.mxu0 0.0
        %765 = vmatpush2.xpose.msra.mxu0 0.0
        %766 = vmatprep.subr.mxu0 0.0
        %767 = vmatpush2.xpose.msra.mxu0 0.0
        %768 = vmatprep.subr.mxu0 0.0
        %769 = vmatpush2.xpose.msra.mxu0 0.0
        %770 = vmatprep.subr.mxu0 0.0
        %771 = vmatpush2.xpose.msra.mxu0 0.0
        %772 = vmatprep.subr.mxu0 0.0
        %773 = vmatpush2.xpose.msra.mxu0 0.0
        %774 = vmatprep.subr.mxu0 0.0
        %775 = vmatpush2.xpose.msra.mxu0 0.0
        %776 = vmatprep.subr.mxu0 0.0
        %777 = vmatpush2.xpose.msra.mxu0 0.0
        %778 = vmatprep.subr.mxu0 0.0
        %779 = vmatpush2.xpose.msra.mxu0 0.0
        %780 = vmatprep.subr.mxu0 0.0
        %781 = vmatpush2.xpose.msra.mxu0 0.0
        %782 = vmatprep.subr.mxu0 0.0
        %783 = vmatpush2.xpose.msra.mxu0 0.0
        %784 = vmatprep.mubr.f32.mxu0 0.0
        %785 = vmatmul.mubr.f32.gmra.mxu0 %v465
        %v786 = vpop.f32.mrf.mxu0
        %v787 = vadd.f32 0.0, %v786
        %v788 = vpop.f32.mrf.mxu0
        %789 = vmatprep.mubr.f32.mxu0 0.0
        %790 = vmatmul.mubr.f32.gmra.mxu0 %v466
        %v791 = vpop.f32.mrf.mxu0
        %v792 = vadd.f32 0.0, %v791
        %v793 = vpop.f32.mrf.mxu0
        %794 = vdwg.mxu0
        %v795 = vadd.f32 %v718, %v787
        %v796 = vadd.f32 %v719, %v792
        %797 = vst [vmem:[#allocation3] sm:$0xff] %v795
        %798 = vst [vmem:[#allocation3 + $0x8] sm:$0xff] %v796
        %p799 = scmp.eq.s32.totalorder %s33, 1
        // Predicated region
        $region61: #{tpu_custom_call.1} parent=39 // pred_check
          %p800 = pneg %p799
        $region62: #{tpu_custom_call.1} parent=39 // pred_check_branch
          %802 = sbr.rel (%p800) target = $region64
        $region63: #{tpu_custom_call.1} parent=39 // pred_region
          %v803 = vld [vmem:[#allocation10] sm:$0xff]
          %v804 = vld [vmem:[#allocation10 + $0x8] sm:$0xff]
          %v805 = vld [vmem:[#allocation3] sm:$0xff]
          %v806 = vld [vmem:[#allocation3 + $0x8] sm:$0xff]
          %v808 = vsel %vm492, %v803, 0
          %v811 = vsel %vm492, %v804, 0
          %813 = vmatprep.subr.mxu0 0.0
          %814 = vmatpush1.msra.mxu0 0.0
          %815 = vmatprep.subr.mxu0 0.0
          %816 = vmatpush1.msra.mxu0 0.0
          %817 = vmatprep.subr.mxu0 0.0
          %818 = vmatpush1.msra.mxu0 0.0
          %819 = vmatprep.subr.mxu0 0.0
          %820 = vmatpush1.msra.mxu0 0.0
          %821 = vmatprep.subr.mxu0 0.0
          %822 = vmatpush1.msra.mxu0 0.0
          %823 = vmatprep.subr.mxu0 0.0
          %824 = vmatpush1.msra.mxu0 0.0
          %825 = vmatprep.subr.mxu0 0.0
          %826 = vmatpush1.msra.mxu0 0.0
          %827 = vmatprep.subr.mxu0 0.0
          %828 = vmatpush1.msra.mxu0 0.0
          %829 = vmatprep.subr.mxu0 0.0
          %830 = vmatpush1.msra.mxu0 0.0
          %831 = vmatprep.subr.mxu0 0.0
          %832 = vmatpush1.msra.mxu0 0.0
          %833 = vmatprep.subr.mxu0 0.0
          %834 = vmatpush1.msra.mxu0 0.0
          %835 = vmatprep.subr.mxu0 0.0
          %836 = vmatpush1.msra.mxu0 0.0
          %837 = vmatprep.subr.mxu0 0.0
          %838 = vmatpush1.msra.mxu0 0.0
          %839 = vmatprep.subr.mxu0 0.0
          %840 = vmatpush1.msra.mxu0 0.0
          %841 = vmatprep.subr.mxu0 0.0
          %842 = vmatpush1.msra.mxu0 %v806
          %843 = vmatprep.subr.mxu0 0.0
          %844 = vmatpush1.msra.mxu0 %v805
          %845 = vmatprep.subr.mxu0 0.0
          %846 = vmatpush2.msra.mxu0 0.0
          %847 = vmatprep.subr.mxu0 0.0
          %848 = vmatpush2.msra.mxu0 0.0
          %849 = vmatprep.subr.mxu0 0.0
          %850 = vmatpush2.msra.mxu0 0.0
          %851 = vmatprep.subr.mxu0 0.0
          %852 = vmatpush2.msra.mxu0 0.0
          %853 = vmatprep.subr.mxu0 0.0
          %854 = vmatpush2.msra.mxu0 0.0
          %855 = vmatprep.subr.mxu0 0.0
          %856 = vmatpush2.msra.mxu0 0.0
          %857 = vmatprep.subr.mxu0 0.0
          %858 = vmatpush2.msra.mxu0 0.0
          %859 = vmatprep.subr.mxu0 0.0
          %860 = vmatpush2.msra.mxu0 0.0
          %861 = vmatprep.subr.mxu0 0.0
          %862 = vmatpush2.msra.mxu0 0.0
          %863 = vmatprep.subr.mxu0 0.0
          %864 = vmatpush2.msra.mxu0 0.0
          %865 = vmatprep.subr.mxu0 0.0
          %866 = vmatpush2.msra.mxu0 0.0
          %867 = vmatprep.subr.mxu0 0.0
          %868 = vmatpush2.msra.mxu0 0.0
          %869 = vmatprep.subr.mxu0 0.0
          %870 = vmatpush2.msra.mxu0 0.0
          %871 = vmatprep.subr.mxu0 0.0
          %872 = vmatpush2.msra.mxu0 0.0
          %873 = vmatprep.subr.mxu0 0.0
          %874 = vmatpush2.msra.mxu0 0.0
          %875 = vmatprep.subr.mxu0 0.0
          %876 = vmatpush2.msra.mxu0 0.0
          %877 = vmatprep.mubr.f32.mxu0 0.0
          %878 = vmatmul.mubr.f32.gmra.mxu0 %v808
          %v879 = vpop.f32.mrf.mxu0
          %v880 = vadd.f32 0.0, %v879
          %v881 = vpop.f32.mrf.mxu0
          %882 = vmatprep.mubr.f32.mxu0 0.0
          %883 = vmatmul.mubr.f32.gmra.mxu0 %v811
          %v884 = vpop.f32.mrf.mxu0
          %v885 = vadd.f32 0.0, %v884
          %v886 = vpop.f32.mrf.mxu0
          %887 = vdwg.mxu0
          %888 = vst [vmem:[%s380] sm:$0xff] %v880
          %889 = vst [vmem:[%s380 + $0x8] sm:$0xff] %v885
        $region64: #{tpu_custom_call.1} parent=39 // pred_fallthru
          _
        %s890 = sand.u32 %s188, 1
        %s891 = scalar_lea.sflag [#allocation6], %s890
        %s892 = sand.u32 %s188, 1
        %s893 = smul.addr %s892, 16
        %s894 = scalar_lea.vmem [#allocation12], %s893
        // Predicated region
        $region65: #{tpu_custom_call.1} parent=39 // pred_check
          %p895 = pneg %p198
        $region66: #{tpu_custom_call.1} parent=39 // pred_check_branch
          %897 = sbr.rel (%p895) target = $region68
        $region67: #{tpu_custom_call.1} parent=39 // pred_region
          %s899 = ssub.s32 256, 256
          %900 = vsyncadd %s891, %s899
          %s901 = smul.addr %s31, 4
          %s902 = sadd.s32 %s32, %s901
          %s903 = smul.addr %s902, 128
          %s904 = scalar_lea.hbm %s5, %s903
          %s905 = sshll.u32 %s894, 4
          %s906 = int_to_ptr.vmem [resolvable:$true] %s905
          %911 = dma.vmem_to_hbm [thread:$0]  %s906, 256, %s904, %s891, 128, 256, 8
        $region68: #{tpu_custom_call.1} parent=39 // pred_fallthru
          _
      $region40: #{tpu_custom_call.1} parent=5 // pred_fallthru
        _
      %p912 = scmp.le.s32.totalorder 2, %s21
      // Predicated region
      $region69: #{tpu_custom_call.1} parent=5 // pred_check
        %p913 = pneg %p912
      $region70: #{tpu_custom_call.1} parent=5 // pred_check_branch
        %915 = sbr.rel (%p913) target = $region72
      $region71: #{tpu_custom_call.1} parent=5 // pred_region
        %s916 = ssub.s32 %s21, 2
        // Predicated region
        $region73: #{tpu_custom_call.1} parent=71 // pred_check
          %p917 = pneg %p204
        $region74: #{tpu_custom_call.1} parent=71 // pred_check_branch
          %919 = sbr.rel (%p917) target = $region76
        $region75: #{tpu_custom_call.1} parent=71 // pred_region
          %s920 = sand.u32 %s189, 1
          %s921 = scalar_lea.sflag [#allocation6], %s920
          %s922 = sand.u32 %s189, 1
          %s923 = smul.addr %s922, 16
          %s924 = scalar_lea.vmem [#allocation12], %s923
          %925 = dma.done %s921, 256
        $region76: #{tpu_custom_call.1} parent=71 // pred_fallthru
          _
      $region72: #{tpu_custom_call.1} parent=5 // pred_fallthru
        _
    $region6: #{tpu_custom_call.1} parent=1 // loop_footer
      %s25 = sadd.s32 1, %s21
    $region7: #{tpu_custom_call.1} parent=1 // loop_footer_branch
      %20 = sbr.rel target = $region3
    $region8: #{tpu_custom_call.1} parent=1 // loop_exit
      _
    %926 = vsyncpa [#allocation5], 1
    %s927 = scalar_lea.sflag [#allocation5], 1
    %928 = vsyncpa %s927, 1
    %929 = vsyncpa [#allocation8], 1
    %s930 = scalar_lea.sflag [#allocation8], 1
    %931 = vsyncpa %s930, 1
    %932 = vsyncpa [#allocation11], 1
    %933 = vsyncpa [#allocation6], 1
    %s934 = scalar_lea.sflag [#allocation6], 1
    %935 = vsyncpa %s934, 1

</llo_original>
